<compile_context>
chip_gen: v6e
topology: v6e:2x2x1
jax: 0.10.0
libtpu: 0.0.40
codegen_flags: <defaults>
</compile_context>

<pallas_src>
import functools

import jax
import jax.numpy as jnp
from jax.experimental import pallas as pl
from jax.experimental.pallas import tpu as pltpu


def _round_up(x: int, m: int) -> int:
    return ((x + m - 1) // m) * m


def _energy_kernel(z_ref, o_ref, *, inv_T, neg_T):
    # (tile_b, C): exp -> row-sum -> log -> scale -> lane-dense (1, tile_b) store.
    z = z_ref[...].astype(jnp.float32)
    # NOTE: no max-subtraction, to match the PyTorch expression
    # `-T * (z/T).exp().sum(-1).log()` exactly (same overflow behaviour).
    s = jnp.sum(jnp.exp(z * inv_T), axis=-1)            # (tile_b,)
    e = neg_T * jnp.log(s)                               # (tile_b,)
    o_ref[...] = e[None, :].astype(o_ref.dtype)          # (1, tile_b) unmasked store


def _choose_tile_b(batch: int, n_classes: int, itemsize: int,
                   target_block_bytes: int = 8 << 20) -> int:
    """Largest row block that keeps ~8 MiB of input per grid step."""
    row_bytes = max(int(n_classes) * int(itemsize), 1)
    tile = max(target_block_bytes // row_bytes, 1)
    if tile >= 128:
        tile = (tile // 128) * 128                        # lane-dense output stores
        tile = min(tile, _round_up(batch, 128))
    else:
        # Very wide rows: keep the block small so one block still fits VMEM.
        # TODO(synk): add a C-tiled accumulator path (second 'arbitrary' grid
        # axis over classes + pl.when init/finalize) for vocab-scale C.
        tile = max((tile // 8) * 8, 8)
        tile = min(tile, _round_up(batch, 8))
    return int(tile)


def energy_pallas(z: jax.Array, T: float = 1.0, reduction: str = "none") -> jax.Array:
    """Pallas TPU implementation of EnergyFunction.forward for z of shape [B, C]."""
    B, C = z.shape
    out_dtype = z.dtype if jnp.issubdtype(z.dtype, jnp.floating) else jnp.float32

    tile_b = _choose_tile_b(B, C, jnp.dtype(z.dtype).itemsize)
    B_pad = _round_up(B, tile_b)
    if B_pad != B:
        # Zero padding is safe: exp(0) is finite and padded rows are sliced off.
        z = jnp.pad(z, ((0, B_pad - B), (0, 0)))
    num_blocks = B_pad // tile_b

    inv_T = 1.0 / float(T)
    neg_T = -float(T)

    e2d = pl.pallas_call(
        functools.partial(_energy_kernel, inv_T=inv_T, neg_T=neg_T),
        out_shape=jax.ShapeDtypeStruct((num_blocks, tile_b), out_dtype),
        grid_spec=pltpu.PrefetchScalarGridSpec(
            num_scalar_prefetch=0,
            grid=(num_blocks,),
            in_specs=[pl.BlockSpec((tile_b, C), lambda i: (i, 0))],
            out_specs=pl.BlockSpec((1, tile_b), lambda i: (i, 0)),
        ),
        compiler_params=pltpu.CompilerParams(
            dimension_semantics=("parallel",),
            # 2 double-buffered ~8 MiB input blocks + tiny outputs: explicit
            # limit lets the big tile compile on v5e (16 MiB scoped default)
            # while staying well inside v7x's 64 MiB physical VMEM.
            vmem_limit_bytes=32 << 20,
        ),
    )(z)

    E = e2d.reshape(B_pad)[:B]   # row-major reshape preserves row order

    # Reduction glue (trivial scalar work) stays in plain JAX.
    if reduction == "mean":
        return E.mean()
    if reduction == "sum":
        return E.sum()
    return E


def energy_ref(z, T: float = 1.0):
    return -T * jnp.log(jnp.exp(z / T).sum(-1))


if __name__ == "__main__":
    key = jax.random.PRNGKey(0)
    B, C = 8, 32
    z = jax.random.normal(key, (B, C), dtype=jnp.float32)

    # f32, multiple temperatures, all reductions.
    for T in (1.0, 2.0):
        ref = energy_ref(z, T)
        for reduction in ("none", "mean", "sum"):
            out = jax.block_until_ready(energy_pallas(z, T=T, reduction=reduction))
            want = {"none": ref, "mean": ref.mean(), "sum": ref.sum()}[reduction]
            assert out.shape == want.shape, (T, reduction, out.shape, want.shape)
            assert jnp.allclose(out, want, atol=1e-5, rtol=1e-5), (T, reduction)

    # Non-divisible batch (exercises the pad + slice path).
    z_odd = jax.random.normal(jax.random.PRNGKey(1), (5, C), dtype=jnp.float32)
    out_odd = jax.block_until_ready(energy_pallas(z_odd))
    assert jnp.allclose(out_odd, energy_ref(z_odd), atol=1e-5, rtol=1e-5)

    # bf16 input accepted (f32 accumulation inside the kernel).
    z_bf16 = z.astype(jnp.bfloat16)
    out_bf16 = jax.block_until_ready(energy_pallas(z_bf16))
    ref_bf16 = energy_ref(z_bf16.astype(jnp.float32))
    assert jnp.allclose(out_bf16.astype(jnp.float32), ref_bf16, atol=5e-2, rtol=5e-2)

    print("KERNEL_OK")
</pallas_src>

<mosaic_0001>
module attributes {stable_mosaic.version = 11 : i64} {
  func.func @_energy_kernel(%arg0: i32, %arg1: memref<128x32xf32, #tpu.memory_space<vmem>>, %arg2: memref<1x128xf32, #tpu.memory_space<vmem>>) attributes {dimension_semantics = [#tpu.dimension_semantics<parallel>], iteration_bounds = array<i64: 1>, scalar_prefetch = 0 : i64, scratch_operands = 0 : i64, tpu.core_type = #tpu.core_type<tc>, window_params = [{transform_indices = @transform_0, window_bounds = array<i64: 128, 32>}, {transform_indices = @transform_1, window_bounds = array<i64: 1, 128>}]} {
    %c0 = arith.constant 0 : index
    %c0_0 = arith.constant 0 : index
    %0 = vector.load %arg1[%c0, %c0_0] : memref<128x32xf32, #tpu.memory_space<vmem>>, vector<128x32xf32>
    %cst = arith.constant 1.000000e+00 : f32
    %1 = vector.broadcast %cst : f32 to vector<128x32xf32>
    %2 = arith.mulf %0, %1 : vector<128x32xf32>
    %3 = math.exp %2 : vector<128x32xf32>
    %cst_1 = arith.constant dense<0.000000e+00> : vector<128xf32>
    %4 = vector.multi_reduction <add>, %3, %cst_1 [1] : vector<128x32xf32> to vector<128xf32>
    %5 = math.log %4 : vector<128xf32>
    %cst_2 = arith.constant -1.000000e+00 : f32
    %6 = vector.broadcast %cst_2 : f32 to vector<128xf32>
    %7 = arith.mulf %6, %5 : vector<128xf32>
    %8 = vector.shape_cast %7 : vector<128xf32> to vector<1x128xf32>
    %c0_3 = arith.constant 0 : index
    %c0_4 = arith.constant 0 : index
    %9 = vector.load %arg2[%c0_3, %c0_4] : memref<1x128xf32, #tpu.memory_space<vmem>>, vector<1x128xf32>
    tpu.vector_store %arg2[%c0_3, %c0_4], %8 {strides = array<i32>} : memref<1x128xf32, #tpu.memory_space<vmem>>, vector<1x128xf32>,
    return
  }
  func.func @transform_0(%arg0: i32) -> (i32, i32) {
    %c0_i32 = arith.constant 0 : i32
    %c0_i32_0 = arith.constant 0 : i32
    return %arg0, %c0_i32 : i32, i32
  }
  func.func @transform_1(%arg0: i32) -> (i32, i32) {
    %c0_i32 = arith.constant 0 : i32
    %c0_i32_0 = arith.constant 0 : i32
    return %arg0, %c0_i32 : i32, i32
  }
}

</mosaic_0001>

<llo_original>
// kernel: tpu_custom_call.1
$region0: #{tpu_custom_call.1}
  #allocation0 [shape = 'u32[]', space=smem, size = 0x4, offset = 0x4, fixed_abs, tag = 'smem constant byte address 0x4 - core index']
  #allocation1 [shape = 'u32[144,128]{1,0:T(1,128)}', space=vmem, size = 0x12000, scoped, tag = 'internal scratch']
  %s0 = inlined_call_operand.vmem [shape: f32[128,32], index: 0, kind: input, shape index: {}]
  %s1 = inlined_call_operand.hbm [shape: f32[1,128], index: 1, kind: output, shape index: {}]
  %s2 = sld [smem:[#allocation0]]
  $region14: #{tpu_custom_call.1} parent=0
    _
  %s4 = ssub.s32 1, %s2
  %s5 = scalar_select 0, %s4, %s2
  $region1: #{tpu_custom_call.1} parent=0
    #allocation2 [shape = 'u8[512]{0}', space=vmem, size = 0x400, scoped, tag = 'output window, operand 0, single buffered']
    #allocation3 [shape = 's32[1]{0}', space=sflag, size = 0x4, scoped, tag = 'scoped memory for tpu_custom_call.1']
    %6 = vsyncpa [#allocation3], 0
    // Predicated region
    $region2: #{tpu_custom_call.1} parent=1 // pred_check
      _
    $region3: #{tpu_custom_call.1} parent=1 // pred_check_branch
      %8 = sbr.rel (0) target = $region5
    $region4: #{tpu_custom_call.1} parent=1 // pred_region
      _
    $region5: #{tpu_custom_call.1} parent=1 // pred_fallthru
      _
    %v9 = vld [vmem:[%s0] sm:$0xff]
    %v10 = vld [vmem:[%s0 + $0x8] sm:$0xff]
    %v11 = vld [vmem:[%s0 + $0x10] sm:$0xff]
    %v12 = vld [vmem:[%s0 + $0x18] sm:$0xff]
    %v13 = vld [vmem:[%s0 + $0x20] sm:$0xff]
    %v14 = vld [vmem:[%s0 + $0x28] sm:$0xff]
    %v15 = vld [vmem:[%s0 + $0x30] sm:$0xff]
    %v16 = vld [vmem:[%s0 + $0x38] sm:$0xff]
    %v17 = vld [vmem:[%s0 + $0x40] sm:$0xff]
    %v18 = vld [vmem:[%s0 + $0x48] sm:$0xff]
    %v19 = vld [vmem:[%s0 + $0x50] sm:$0xff]
    %v20 = vld [vmem:[%s0 + $0x58] sm:$0xff]
    %v21 = vld [vmem:[%s0 + $0x60] sm:$0xff]
    %v22 = vld [vmem:[%s0 + $0x68] sm:$0xff]
    %v23 = vld [vmem:[%s0 + $0x70] sm:$0xff]
    %v24 = vld [vmem:[%s0 + $0x78] sm:$0xff]
    %v25 = vmul.f32 %v9, 1.442695
    %v26 = vpow.pop %v25
    %v27 = vmul.f32 %v10, 1.442695
    %v28 = vpow.pop %v27
    %v29 = vmul.f32 %v11, 1.442695
    %v30 = vpow.pop %v29
    %v31 = vmul.f32 %v12, 1.442695
    %v32 = vpow.pop %v31
    %v33 = vmul.f32 %v13, 1.442695
    %v34 = vpow.pop %v33
    %v35 = vmul.f32 %v14, 1.442695
    %v36 = vpow.pop %v35
    %v37 = vmul.f32 %v15, 1.442695
    %v38 = vpow.pop %v37
    %v39 = vmul.f32 %v16, 1.442695
    %v40 = vpow.pop %v39
    %v41 = vmul.f32 %v17, 1.442695
    %v42 = vpow.pop %v41
    %v43 = vmul.f32 %v18, 1.442695
    %v44 = vpow.pop %v43
    %v45 = vmul.f32 %v19, 1.442695
    %v46 = vpow.pop %v45
    %v47 = vmul.f32 %v20, 1.442695
    %v48 = vpow.pop %v47
    %v49 = vmul.f32 %v21, 1.442695
    %v50 = vpow.pop %v49
    %v51 = vmul.f32 %v22, 1.442695
    %v52 = vpow.pop %v51
    %v53 = vmul.f32 %v23, 1.442695
    %v54 = vpow.pop %v53
    %v55 = vmul.f32 %v24, 1.442695
    %v56 = vpow.pop %v55
    %vm57 = vcmask 261120
    %v58 = vsel %vm57, %v26, 0.0
    %59 = vadd.xlane.f32.xlu0 %v58
    %v60 = vpop.xlane.xlu0 %59
    %v61 = vsel %vm57, %v28, 0.0
    %62 = vadd.xlane.f32.xlu0 %v61
    %v63 = vpop.xlane.xlu0 %62
    %v64 = vsel %vm57, %v30, 0.0
    %65 = vadd.xlane.f32.xlu0 %v64
    %v66 = vpop.xlane.xlu0 %65
    %v67 = vsel %vm57, %v32, 0.0
    %68 = vadd.xlane.f32.xlu0 %v67
    %v69 = vpop.xlane.xlu0 %68
    %v70 = vsel %vm57, %v34, 0.0
    %71 = vadd.xlane.f32.xlu0 %v70
    %v72 = vpop.xlane.xlu0 %71
    %v73 = vsel %vm57, %v36, 0.0
    %74 = vadd.xlane.f32.xlu0 %v73
    %v75 = vpop.xlane.xlu0 %74
    %v76 = vsel %vm57, %v38, 0.0
    %77 = vadd.xlane.f32.xlu0 %v76
    %v78 = vpop.xlane.xlu0 %77
    %v79 = vsel %vm57, %v40, 0.0
    %80 = vadd.xlane.f32.xlu0 %v79
    %v81 = vpop.xlane.xlu0 %80
    %v82 = vsel %vm57, %v42, 0.0
    %83 = vadd.xlane.f32.xlu0 %v82
    %v84 = vpop.xlane.xlu0 %83
    %v85 = vsel %vm57, %v44, 0.0
    %86 = vadd.xlane.f32.xlu0 %v85
    %v87 = vpop.xlane.xlu0 %86
    %v88 = vsel %vm57, %v46, 0.0
    %89 = vadd.xlane.f32.xlu0 %v88
    %v90 = vpop.xlane.xlu0 %89
    %v91 = vsel %vm57, %v48, 0.0
    %92 = vadd.xlane.f32.xlu0 %v91
    %v93 = vpop.xlane.xlu0 %92
    %v94 = vsel %vm57, %v50, 0.0
    %95 = vadd.xlane.f32.xlu0 %v94
    %v96 = vpop.xlane.xlu0 %95
    %v97 = vsel %vm57, %v52, 0.0
    %98 = vadd.xlane.f32.xlu0 %v97
    %v99 = vpop.xlane.xlu0 %98
    %v100 = vsel %vm57, %v54, 0.0
    %101 = vadd.xlane.f32.xlu0 %v100
    %v102 = vpop.xlane.xlu0 %101
    %v103 = vsel %vm57, %v56, 0.0
    %104 = vadd.xlane.f32.xlu0 %v103
    %v105 = vpop.xlane.xlu0 %104
    %v106 = vlog2.pop %v60
    %v107 = vmul.f32 %v106, 0.6931472
    %v108 = vlog2.pop %v63
    %v109 = vmul.f32 %v108, 0.6931472
    %v110 = vlog2.pop %v66
    %v111 = vmul.f32 %v110, 0.6931472
    %v112 = vlog2.pop %v69
    %v113 = vmul.f32 %v112, 0.6931472
    %v114 = vlog2.pop %v72
    %v115 = vmul.f32 %v114, 0.6931472
    %v116 = vlog2.pop %v75
    %v117 = vmul.f32 %v116, 0.6931472
    %v118 = vlog2.pop %v78
    %v119 = vmul.f32 %v118, 0.6931472
    %v120 = vlog2.pop %v81
    %v121 = vmul.f32 %v120, 0.6931472
    %v122 = vlog2.pop %v84
    %v123 = vmul.f32 %v122, 0.6931472
    %v124 = vlog2.pop %v87
    %v125 = vmul.f32 %v124, 0.6931472
    %v126 = vlog2.pop %v90
    %v127 = vmul.f32 %v126, 0.6931472
    %v128 = vlog2.pop %v93
    %v129 = vmul.f32 %v128, 0.6931472
    %v130 = vlog2.pop %v96
    %v131 = vmul.f32 %v130, 0.6931472
    %v132 = vlog2.pop %v99
    %v133 = vmul.f32 %v132, 0.6931472
    %v134 = vlog2.pop %v102
    %v135 = vmul.f32 %v134, 0.6931472
    %v136 = vlog2.pop %v105
    %v137 = vmul.f32 %v136, 0.6931472
    %v138 = vmul.f32 %v107, -1.0
    %v139 = vmul.f32 %v109, -1.0
    %v140 = vmul.f32 %v111, -1.0
    %v141 = vmul.f32 %v113, -1.0
    %v142 = vmul.f32 %v115, -1.0
    %v143 = vmul.f32 %v117, -1.0
    %v144 = vmul.f32 %v119, -1.0
    %v145 = vmul.f32 %v121, -1.0
    %v146 = vmul.f32 %v123, -1.0
    %v147 = vmul.f32 %v125, -1.0
    %v148 = vmul.f32 %v127, -1.0
    %v149 = vmul.f32 %v129, -1.0
    %v150 = vmul.f32 %v131, -1.0
    %v151 = vmul.f32 %v133, -1.0
    %v152 = vmul.f32 %v135, -1.0
    %v153 = vmul.f32 %v137, -1.0
    %v170 = vlaneseq
    %v171 = vand.u32 %v170, 127
    %v172 = vlaneseq
    %v173 = vshrl.u32 %v172, 7
    %v174 = vsub.s32 %v171, %v173
    %v175 = vrot.slane %v138, %v174
    %v176 = vadd.s32 %v171, 4294967288
    %v177 = vlaneseq
    %v178 = vshrl.u32 %v177, 7
    %v179 = vsub.s32 %v176, %v178
    %v180 = vrot.slane %v139, %v179
    %vm181 = vcmask 130112
    %v182 = vsel %vm181, %v180, %v175
    %v183 = vadd.s32 %v171, 4294967280
    %v184 = vlaneseq
    %v185 = vshrl.u32 %v184, 7
    %v186 = vsub.s32 %v183, %v185
    %v187 = vrot.slane %v140, %v186
    %vm188 = vcmask 195712
    %v189 = vsel %vm188, %v187, %v182
    %v190 = vadd.s32 %v171, 4294967272
    %v191 = vlaneseq
    %v192 = vshrl.u32 %v191, 7
    %v193 = vsub.s32 %v190, %v192
    %v194 = vrot.slane %v141, %v193
    %vm195 = vcmask 261312
    %v196 = vsel %vm195, %v194, %v189
    %v197 = vadd.s32 %v171, 4294967264
    %v198 = vlaneseq
    %v199 = vshrl.u32 %v198, 7
    %v200 = vsub.s32 %v197, %v199
    %v201 = vrot.slane %v142, %v200
    %vm202 = vcmask 326912
    %v203 = vsel %vm202, %v201, %v196
    %v204 = vadd.s32 %v171, 4294967256
    %v205 = vlaneseq
    %v206 = vshrl.u32 %v205, 7
    %v207 = vsub.s32 %v204, %v206
    %v208 = vrot.slane %v143, %v207
    %vm209 = vcmask 392512
    %v210 = vsel %vm209, %v208, %v203
    %v211 = vadd.s32 %v171, 4294967248
    %v212 = vlaneseq
    %v213 = vshrl.u32 %v212, 7
    %v214 = vsub.s32 %v211, %v213
    %v215 = vrot.slane %v144, %v214
    %vm216 = vcmask 458112
    %v217 = vsel %vm216, %v215, %v210
    %v218 = vadd.s32 %v171, 4294967240
    %v219 = vlaneseq
    %v220 = vshrl.u32 %v219, 7
    %v221 = vsub.s32 %v218, %v220
    %v222 = vrot.slane %v145, %v221
    %vm223 = vcmask 523712
    %v224 = vsel %vm223, %v222, %v217
    %v225 = vadd.s32 %v171, 4294967232
    %v226 = vlaneseq
    %v227 = vshrl.u32 %v226, 7
    %v228 = vsub.s32 %v225, %v227
    %v229 = vrot.slane %v146, %v228
    %vm230 = vcmask 589312
    %v231 = vsel %vm230, %v229, %v224
    %v232 = vadd.s32 %v171, 4294967224
    %v233 = vlaneseq
    %v234 = vshrl.u32 %v233, 7
    %v235 = vsub.s32 %v232, %v234
    %v236 = vrot.slane %v147, %v235
    %vm237 = vcmask 654912
    %v238 = vsel %vm237, %v236, %v231
    %v239 = vadd.s32 %v171, 4294967216
    %v240 = vlaneseq
    %v241 = vshrl.u32 %v240, 7
    %v242 = vsub.s32 %v239, %v241
    %v243 = vrot.slane %v148, %v242
    %vm244 = vcmask 720512
    %v245 = vsel %vm244, %v243, %v238
    %v246 = vadd.s32 %v171, 4294967208
    %v247 = vlaneseq
    %v248 = vshrl.u32 %v247, 7
    %v249 = vsub.s32 %v246, %v248
    %v250 = vrot.slane %v149, %v249
    %vm251 = vcmask 786112
    %v252 = vsel %vm251, %v250, %v245
    %v253 = vadd.s32 %v171, 4294967200
    %v254 = vlaneseq
    %v255 = vshrl.u32 %v254, 7
    %v256 = vsub.s32 %v253, %v255
    %v257 = vrot.slane %v150, %v256
    %vm258 = vcmask 851712
    %v259 = vsel %vm258, %v257, %v252
    %v260 = vadd.s32 %v171, 4294967192
    %v261 = vlaneseq
    %v262 = vshrl.u32 %v261, 7
    %v263 = vsub.s32 %v260, %v262
    %v264 = vrot.slane %v151, %v263
    %vm265 = vcmask 917312
    %v266 = vsel %vm265, %v264, %v259
    %v267 = vadd.s32 %v171, 4294967184
    %v268 = vlaneseq
    %v269 = vshrl.u32 %v268, 7
    %v270 = vsub.s32 %v267, %v269
    %v271 = vrot.slane %v152, %v270
    %vm272 = vcmask 982912
    %v273 = vsel %vm272, %v271, %v266
    %v274 = vadd.s32 %v171, 4294967176
    %v275 = vlaneseq
    %v276 = vshrl.u32 %v275, 7
    %v277 = vsub.s32 %v274, %v276
    %v278 = vrot.slane %v153, %v277
    %vm279 = vcmask 1048512
    %v280 = vsel %vm279, %v278, %v273
    %282 = vst [vmem:[#allocation2] sm:$0x1] %v280
    // Predicated region
    $region6: #{tpu_custom_call.1} parent=1 // pred_check
      _
    $region7: #{tpu_custom_call.1} parent=1 // pred_check_branch
      %284 = sbr.rel (0) target = $region9
    $region8: #{tpu_custom_call.1} parent=1 // pred_region
      %s286 = ssub.s32 16, 16
      %287 = vsyncadd [#allocation3], %s286
      %s289 = sshll.u32 [#allocation2], 4
      %s290 = int_to_ptr.vmem [resolvable:$true] %s289
      %292 = dma.vmem_to_hbm [thread:$0]  %s290, 16, %s1, [#allocation3]
    $region9: #{tpu_custom_call.1} parent=1 // pred_fallthru
      _
    // Predicated region
    $region10: #{tpu_custom_call.1} parent=1 // pred_check
      _
    $region11: #{tpu_custom_call.1} parent=1 // pred_check_branch
      %294 = sbr.rel (0) target = $region13
    $region12: #{tpu_custom_call.1} parent=1 // pred_region
      %295 = dma.done [#allocation3], 16
    $region13: #{tpu_custom_call.1} parent=1 // pred_fallthru
      _
    %296 = vsyncpa [#allocation3], 1

</llo_original>
